<compile_context>
chip_gen: v5e
topology: v5e:2x2
jax: 0.10.0
libtpu: 0.0.40
codegen_flags: <defaults>
</compile_context>

<pallas_src>
import functools

import jax
import jax.numpy as jnp
from jax.experimental import pallas as pl
from jax.experimental.pallas import tpu as pltpu

LANE = 128  # vreg lane width; output feature dims are zero-padded to multiples of this.


def _round_up(n, m):
    return ((n + m - 1) // m) * m


def _actor_policy_kernel(obs_ref, w_rep_ref, w_h_ref, w_out_ref, bias_ref,
                         *out_refs,
                         action_dim, rep_pad, hid_pad, act_pad, emit_state):
    """Fused representation-MLP + ActorNet forward for one batch tile.

    Matmuls run on the MXU with bf16 inputs / f32 accumulation; bias add + ReLU
    are f32 VPU ops. Weights/biases are VMEM-resident across the whole batch grid.
    """
    if emit_state:
        state_ref, logits_ref = out_refs
    else:
        (logits_ref,) = out_refs

    x = obs_ref[...].astype(jnp.bfloat16)  # (TILE_B, obs_dim), logical width (no pad)

    # Representation: Linear + ReLU  -> outputs['state']
    h_rep = jnp.dot(x, w_rep_ref[...], preferred_element_type=jnp.float32)
    h_rep = jnp.maximum(h_rep + bias_ref[0:1, :rep_pad], 0.0)
    if emit_state:
        state_ref[...] = h_rep.astype(state_ref.dtype)  # lane-dense full-width store

    # ActorNet hidden layer: Linear + ReLU
    h_act = jnp.dot(h_rep.astype(jnp.bfloat16), w_h_ref[...],
                    preferred_element_type=jnp.float32)
    h_act = jnp.maximum(h_act + bias_ref[1:2, :hid_pad], 0.0)

    # ActorNet output layer: Linear (no activation) -> categorical logits.
    logits = jnp.dot(h_act.astype(jnp.bfloat16), w_out_ref[...],
                     preferred_element_type=jnp.float32)
    logits = logits + bias_ref[2:3, :act_pad]
    # Mask padded action lanes to -inf so padded logits are safe for softmax/sampling.
    col = jax.lax.broadcasted_iota(jnp.int32, logits.shape, 1)
    logits_ref[...] = jnp.where(col < action_dim, logits, -jnp.inf).astype(logits_ref.dtype)


def init_params(key, obs_dim, rep_dim, actor_hidden, action_dim):
    """Deterministic parameter init matching torch.nn.Linear defaults.

    Returns logical (unpadded) f32 params; W stored as (in, out)."""
    k1, k2, k3 = jax.random.split(key, 3)

    def linear(k, fan_in, fan_out):
        bound = 1.0 / jnp.sqrt(fan_in)
        kw, kb = jax.random.split(k)
        w = jax.random.uniform(kw, (fan_in, fan_out), jnp.float32, -bound, bound)
        b = jax.random.uniform(kb, (1, fan_out), jnp.float32, -bound, bound)
        return w, b

    w_rep, b_rep = linear(k1, obs_dim, rep_dim)
    w_h, b_h = linear(k2, rep_dim, actor_hidden)
    w_out, b_out = linear(k3, actor_hidden, action_dim)
    return {"w_rep": w_rep, "b_rep": b_rep,
            "w_h": w_h, "b_h": b_h,
            "w_out": w_out, "b_out": b_out}


def prepare_params(params):
    """One-time host-side packing outside the hot loop.

    * Output feature dims (rep / hidden / action) are zero-padded to multiples of
      128 for lane-dense stores; w_rep keeps its logical K = obs_dim (no obs pad).
    * Weights are cast to bf16 (MXU-native); biases stay f32 and are packed into a
      single (3, max_pad) array (rows: rep, hidden, out).
    Padding is numerically exact: padded columns/rows are zero, and padded logit
    lanes are masked to -inf inside the kernel.
    """
    obs_dim, rep_dim = params["w_rep"].shape
    hidden_dim = params["w_h"].shape[1]
    action_dim = params["w_out"].shape[1]

    rep_pad = _round_up(rep_dim, LANE)
    hid_pad = _round_up(hidden_dim, LANE)
    act_pad = _round_up(action_dim, LANE)
    bias_pad = max(rep_pad, hid_pad, act_pad)

    def pad_w(w, ki_pad, ko_pad):
        di, do = w.shape
        return jnp.pad(w, ((0, ki_pad - di), (0, ko_pad - do))).astype(jnp.bfloat16)

    biases = jnp.zeros((3, bias_pad), jnp.float32)
    biases = biases.at[0, :rep_dim].set(params["b_rep"][0])
    biases = biases.at[1, :hidden_dim].set(params["b_h"][0])
    biases = biases.at[2, :action_dim].set(params["b_out"][0])

    padded = {
        "w_rep": pad_w(params["w_rep"], obs_dim, rep_pad),   # K kept at logical obs_dim
        "w_h": pad_w(params["w_h"], rep_pad, hid_pad),
        "w_out": pad_w(params["w_out"], hid_pad, act_pad),
        "biases": biases,
    }
    dims = {"obs_dim": obs_dim, "rep_dim": rep_dim,
            "hidden_dim": hidden_dim, "action_dim": action_dim,
            "rep_pad": rep_pad, "hid_pad": hid_pad, "act_pad": act_pad,
            "bias_pad": bias_pad}
    return padded, dims


def _select_tile_b(B):
    """Adaptive batch tile.

    Small (inference) batches: a single tile of round_up(B, 8) rows — no 64x row
    waste per action-selection call. Large (training) batches: tiles up to 512 to
    amortize the ~0.35us per-grid-step overhead, but always >= 2 grid steps so the
    "parallel" axis can shard across both TensorCores on v7x.
    """
    b8 = _round_up(max(B, 1), 8)
    if b8 <= 256:
        return b8
    half = _round_up((b8 + 1) // 2, 8)
    return min(512, half)


def actor_policy_forward(obs, padded_params, dims, *, tile_b=None, return_state=True):
    """Wrapper mirroring ActorPolicy.forward.

    Returns (outputs, logits, None); outputs = {'state': rep_features} (or {} when
    return_state=False, e.g. logits-only action selection).
    """
    B, obs_dim_in = obs.shape
    obs_dim = dims["obs_dim"]
    if obs_dim_in != obs_dim:
        raise ValueError(f"observation width {obs_dim_in} != expected {obs_dim}")

    rep_pad, hid_pad, act_pad, bias_pad = (dims["rep_pad"], dims["hid_pad"],
                                           dims["act_pad"], dims["bias_pad"])

    if tile_b is None:
        tile_b = _select_tile_b(B)
    assert tile_b % 8 == 0, "tile_b must be a multiple of 8 sublanes"

    # Pad batch rows only (zero rows; sliced off below). No feature padding on obs.
    b_pad = _round_up(max(B, 1), tile_b)
    obs_p = jnp.pad(obs, ((0, b_pad - B), (0, 0))) if b_pad != B else obs

    grid = (b_pad // tile_b,)

    cost = pl.CostEstimate(
        flops=2 * b_pad * (obs_dim * rep_pad + rep_pad * hid_pad + hid_pad * act_pad),
        transcendentals=0,
        bytes_accessed=(4 * b_pad * obs_dim                                   # obs in (f32)
                        + 2 * (obs_dim * rep_pad + rep_pad * hid_pad
                               + hid_pad * act_pad)                           # bf16 weights
                        + 4 * 3 * bias_pad                                    # biases
                        + 4 * b_pad * act_pad                                 # logits out
                        + (4 * b_pad * rep_pad if return_state else 0)),      # state out
    )

    out_shape = [jax.ShapeDtypeStruct((b_pad, act_pad), jnp.float32)]
    out_specs = [pl.BlockSpec((tile_b, act_pad), lambda i: (i, 0))]
    if return_state:
        out_shape = [jax.ShapeDtypeStruct((b_pad, rep_pad), jnp.float32)] + out_shape
        out_specs = [pl.BlockSpec((tile_b, rep_pad), lambda i: (i, 0))] + out_specs

    kernel = functools.partial(
        _actor_policy_kernel,
        action_dim=dims["action_dim"], rep_pad=rep_pad, hid_pad=hid_pad,
        act_pad=act_pad, emit_state=return_state)

    results = pl.pallas_call(
        kernel,
        out_shape=tuple(out_shape),
        grid=grid,
        in_specs=[
            # Batch-tiled observation block at its logical width (double-buffered).
            pl.BlockSpec((tile_b, obs_dim), lambda i: (i, 0)),
            # Weight-stationary params: constant index_map -> DMA'd once, VMEM-resident.
            pl.BlockSpec((obs_dim, rep_pad), lambda i: (0, 0)),
            pl.BlockSpec((rep_pad, hid_pad), lambda i: (0, 0)),
            pl.BlockSpec((hid_pad, act_pad), lambda i: (0, 0)),
            pl.BlockSpec((3, bias_pad), lambda i: (0, 0)),
        ],
        out_specs=tuple(out_specs),
        compiler_params=pltpu.CompilerParams(
            dimension_semantics=("parallel",),  # megacore sharding on v7x; no-op on v5e/v6e
        ),
        cost_estimate=cost,
    )(obs_p,
      padded_params["w_rep"], padded_params["w_h"], padded_params["w_out"],
      padded_params["biases"])

    if return_state:
        state_p, logits_p = results
        outputs = {"state": state_p[:B, :dims["rep_dim"]]}
    else:
        (logits_p,) = results
        outputs = {}
    logits = logits_p[:B, :dims["action_dim"]]
    # TODO(synk): if a critic/value head is also lowered to Pallas, fuse it here so
    # 'state' never leaves VMEM.
    return outputs, logits, None


def _reference(obs, p):
    h = jnp.maximum(obs @ p["w_rep"] + p["b_rep"], 0.0)
    a = jnp.maximum(h @ p["w_h"] + p["b_h"], 0.0)
    return h, a @ p["w_out"] + p["b_out"]


if __name__ == "__main__":
    OBS_DIM, REP_DIM, ACTOR_HIDDEN, ACTION_DIM = 16, 32, 32, 5
    # bf16 MXU inputs with f32 accumulation -> relaxed tolerances vs. the f32 reference.
    TOL = dict(atol=5e-2, rtol=5e-2)

    key = jax.random.PRNGKey(0)
    k_obs, k_params = jax.random.split(key)
    params = init_params(k_params, OBS_DIM, REP_DIM, ACTOR_HIDDEN, ACTION_DIM)
    padded_params, dims = prepare_params(params)  # one-time host-side packing

    # Training-size batch, auto tile (single 256-row tile).
    B = 256
    obs = jax.random.normal(k_obs, (B, OBS_DIM), jnp.float32)
    outputs, logits, terminals = actor_policy_forward(obs, padded_params, dims)
    jax.block_until_ready((outputs["state"], logits))

    ref_state, ref_logits = _reference(obs, params)
    assert outputs["state"].shape == (B, REP_DIM)
    assert logits.shape == (B, ACTION_DIM)
    assert jnp.allclose(outputs["state"], ref_state, **TOL)
    assert jnp.allclose(logits, ref_logits, **TOL)
    assert terminals is None

    # Multi-tile grid (exercises the "parallel" batch axis / megacore path).
    out_mt, logits_mt, _ = actor_policy_forward(obs, padded_params, dims, tile_b=128)
    jax.block_until_ready((out_mt["state"], logits_mt))
    assert jnp.allclose(out_mt["state"], ref_state, **TOL)
    assert jnp.allclose(logits_mt, ref_logits, **TOL)

    # Small inference batch (module-style B=2): adaptive 8-row tile, no 128-row pad.
    obs_small = obs[:2]
    out_s, logits_s, _ = actor_policy_forward(obs_small, padded_params, dims)
    jax.block_until_ready((out_s["state"], logits_s))
    assert jnp.allclose(out_s["state"], ref_state[:2], **TOL)
    assert jnp.allclose(logits_s, ref_logits[:2], **TOL)

    # Logits-only path (skips the 'state' HBM writeback entirely).
    out_l, logits_l, _ = actor_policy_forward(obs, padded_params, dims, return_state=False)
    jax.block_until_ready(logits_l)
    assert out_l == {}
    assert jnp.allclose(logits_l, ref_logits, **TOL)

    print("KERNEL_OK")
</pallas_src>

<mosaic_0001>
module attributes {stable_mosaic.version = 11 : i64} {
  func.func @_actor_policy_kernel(%arg0: i32, %arg1: memref<256x16xf32, #tpu.memory_space<vmem>>, %arg2: memref<16x128xbf16, #tpu.memory_space<vmem>>, %arg3: memref<128x128xbf16, #tpu.memory_space<vmem>>, %arg4: memref<128x128xbf16, #tpu.memory_space<vmem>>, %arg5: memref<3x128xf32, #tpu.memory_space<vmem>>, %arg6: memref<256x128xf32, #tpu.memory_space<vmem>>, %arg7: memref<256x128xf32, #tpu.memory_space<vmem>>) attributes {dimension_semantics = [#tpu.dimension_semantics<parallel>], iteration_bounds = array<i64: 1>, scalar_prefetch = 0 : i64, scratch_operands = 0 : i64, tpu.core_type = #tpu.core_type<tc>, window_params = [{transform_indices = @transform_0, window_bounds = array<i64: 256, 16>}, {pipeline_mode = #tpu.pipeline_mode<synchronous>, transform_indices = @transform_1, window_bounds = array<i64: 16, 128>}, {pipeline_mode = #tpu.pipeline_mode<synchronous>, transform_indices = @transform_2, window_bounds = array<i64: 128, 128>}, {pipeline_mode = #tpu.pipeline_mode<synchronous>, transform_indices = @transform_3, window_bounds = array<i64: 128, 128>}, {pipeline_mode = #tpu.pipeline_mode<synchronous>, transform_indices = @transform_4, window_bounds = array<i64: 3, 128>}, {transform_indices = @transform_5, window_bounds = array<i64: 256, 128>}, {transform_indices = @transform_6, window_bounds = array<i64: 256, 128>}]} {
    %c0 = arith.constant 0 : index
    %c0_0 = arith.constant 0 : index
    %0 = vector.load %arg1[%c0, %c0_0] : memref<256x16xf32, #tpu.memory_space<vmem>>, vector<256x16xf32>
    %1 = arith.truncf %0 : vector<256x16xf32> to vector<256x16xbf16>
    %c0_1 = arith.constant 0 : index
    %c0_2 = arith.constant 0 : index
    %2 = vector.load %arg2[%c0_1, %c0_2] : memref<16x128xbf16, #tpu.memory_space<vmem>>, vector<16x128xbf16>
    %cst = arith.constant dense<0.000000e+00> : vector<256x128xf32>
    %3 = tpu.matmul %1, %2, %cst {dimension_numbers = #tpu.dot_dimension_numbers<[1], [0], [0], [1], [0, 0, 1, 1], [], []>} : vector<256x16xbf16>, vector<16x128xbf16>, vector<256x128xf32> -> vector<256x128xf32>
    %c0_3 = arith.constant 0 : index
    %c0_4 = arith.constant 0 : index
    %4 = vector.load %arg5[%c0_3, %c0_4] : memref<3x128xf32, #tpu.memory_space<vmem>>, vector<1x128xf32>
    %5 = vector.broadcast %4 : vector<1x128xf32> to vector<256x128xf32>
    %6 = arith.addf %3, %5 : vector<256x128xf32>
    %cst_5 = arith.constant 0.000000e+00 : f32
    %7 = vector.broadcast %cst_5 : f32 to vector<256x128xf32>
    %8 = arith.maximumf %6, %7 : vector<256x128xf32>
    %c0_6 = arith.constant 0 : index
    %c0_7 = arith.constant 0 : index
    %9 = vector.load %arg6[%c0_6, %c0_7] : memref<256x128xf32, #tpu.memory_space<vmem>>, vector<256x128xf32>
    tpu.vector_store %arg6[%c0_6, %c0_7], %8 {strides = array<i32>} : memref<256x128xf32, #tpu.memory_space<vmem>>, vector<256x128xf32>,
    %10 = arith.truncf %8 : vector<256x128xf32> to vector<256x128xbf16>
    %c0_8 = arith.constant 0 : index
    %c0_9 = arith.constant 0 : index
    %11 = vector.load %arg3[%c0_8, %c0_9] : memref<128x128xbf16, #tpu.memory_space<vmem>>, vector<128x128xbf16>
    %cst_10 = arith.constant dense<0.000000e+00> : vector<256x128xf32>
    %12 = tpu.matmul %10, %11, %cst_10 {dimension_numbers = #tpu.dot_dimension_numbers<[1], [0], [0], [1], [0, 0, 1, 1], [], []>} : vector<256x128xbf16>, vector<128x128xbf16>, vector<256x128xf32> -> vector<256x128xf32>
    %c1 = arith.constant 1 : index
    %c0_11 = arith.constant 0 : index
    %13 = vector.load %arg5[%c1, %c0_11] : memref<3x128xf32, #tpu.memory_space<vmem>>, vector<1x128xf32>
    %14 = vector.broadcast %13 : vector<1x128xf32> to vector<256x128xf32>
    %15 = arith.addf %12, %14 : vector<256x128xf32>
    %cst_12 = arith.constant 0.000000e+00 : f32
    %16 = vector.broadcast %cst_12 : f32 to vector<256x128xf32>
    %17 = arith.maximumf %15, %16 : vector<256x128xf32>
    %18 = arith.truncf %17 : vector<256x128xf32> to vector<256x128xbf16>
    %c0_13 = arith.constant 0 : index
    %c0_14 = arith.constant 0 : index
    %19 = vector.load %arg4[%c0_13, %c0_14] : memref<128x128xbf16, #tpu.memory_space<vmem>>, vector<128x128xbf16>
    %cst_15 = arith.constant dense<0.000000e+00> : vector<256x128xf32>
    %20 = tpu.matmul %18, %19, %cst_15 {dimension_numbers = #tpu.dot_dimension_numbers<[1], [0], [0], [1], [0, 0, 1, 1], [], []>} : vector<256x128xbf16>, vector<128x128xbf16>, vector<256x128xf32> -> vector<256x128xf32>
    %c2 = arith.constant 2 : index
    %c0_16 = arith.constant 0 : index
    %21 = vector.load %arg5[%c2, %c0_16] : memref<3x128xf32, #tpu.memory_space<vmem>>, vector<1x128xf32>
    %22 = vector.broadcast %21 : vector<1x128xf32> to vector<256x128xf32>
    %23 = arith.addf %20, %22 : vector<256x128xf32>
    %24 = tpu.iota {dimensions = array<i32: 1>} : vector<256x128xi32>
    %c5_i32 = arith.constant 5 : i32
    %25 = vector.broadcast %c5_i32 : i32 to vector<256x128xi32>
    %26 = arith.cmpi slt, %24, %25 : vector<256x128xi32>
    %cst_17 = arith.constant 0xFF800000 : f32
    %27 = vector.broadcast %cst_17 : f32 to vector<256x128xf32>
    %28 = arith.select %26, %23, %27 : vector<256x128xi1>, vector<256x128xf32>
    %c0_18 = arith.constant 0 : index
    %c0_19 = arith.constant 0 : index
    %29 = vector.load %arg7[%c0_18, %c0_19] : memref<256x128xf32, #tpu.memory_space<vmem>>, vector<256x128xf32>
    tpu.vector_store %arg7[%c0_18, %c0_19], %28 {strides = array<i32>} : memref<256x128xf32, #tpu.memory_space<vmem>>, vector<256x128xf32>,
    return
  }
  func.func @transform_0(%arg0: i32) -> (i32, i32) {
    %c0_i32 = arith.constant 0 : i32
    %c0_i32_0 = arith.constant 0 : i32
    return %arg0, %c0_i32 : i32, i32
  }
  func.func @transform_1(%arg0: i32) -> (i32, i32) {
    %c0_i32 = arith.constant 0 : i32
    %c0_i32_0 = arith.constant 0 : i32
    %c0_i32_1 = arith.constant 0 : i32
    return %c0_i32, %c0_i32_0 : i32, i32
  }
  func.func @transform_2(%arg0: i32) -> (i32, i32) {
    %c0_i32 = arith.constant 0 : i32
    %c0_i32_0 = arith.constant 0 : i32
    %c0_i32_1 = arith.constant 0 : i32
    return %c0_i32, %c0_i32_0 : i32, i32
  }
  func.func @transform_3(%arg0: i32) -> (i32, i32) {
    %c0_i32 = arith.constant 0 : i32
    %c0_i32_0 = arith.constant 0 : i32
    %c0_i32_1 = arith.constant 0 : i32
    return %c0_i32, %c0_i32_0 : i32, i32
  }
  func.func @transform_4(%arg0: i32) -> (i32, i32) {
    %c0_i32 = arith.constant 0 : i32
    %c0_i32_0 = arith.constant 0 : i32
    %c0_i32_1 = arith.constant 0 : i32
    return %c0_i32, %c0_i32_0 : i32, i32
  }
  func.func @transform_5(%arg0: i32) -> (i32, i32) {
    %c0_i32 = arith.constant 0 : i32
    %c0_i32_0 = arith.constant 0 : i32
    return %arg0, %c0_i32 : i32, i32
  }
  func.func @transform_6(%arg0: i32) -> (i32, i32) {
    %c0_i32 = arith.constant 0 : i32
    %c0_i32_0 = arith.constant 0 : i32
    return %arg0, %c0_i32 : i32, i32
  }
}

</mosaic_0001>

<llo_original>
// kernel: tpu_custom_call.1
$region0: #{tpu_custom_call.1}
  #allocation0 [shape = 'u32[]', space=smem, size = 0x4, offset = 0x4, fixed_abs, tag = 'smem constant byte address 0x4 - core index']
  #allocation1 [shape = 'u32[72,128]{1,0:T(1,128)}', space=vmem, size = 0x9000, scoped, tag = 'internal scratch']
  %s0 = inlined_call_operand.vmem [shape: f32[256,16], index: 0, kind: input, shape index: {}]
  %s1 = inlined_call_operand.vmem [shape: bf16[16,128], index: 1, kind: input, shape index: {}]
  %s2 = inlined_call_operand.vmem [shape: bf16[128,128], index: 2, kind: input, shape index: {}]
  %s3 = inlined_call_operand.vmem [shape: bf16[128,128], index: 3, kind: input, shape index: {}]
  %s4 = inlined_call_operand.vmem [shape: f32[3,128], index: 4, kind: input, shape index: {}]
  %s5 = inlined_call_operand.hbm [shape: f32[256,128], index: 5, kind: output, shape index: {0}]
  %s6 = inlined_call_operand.hbm [shape: f32[256,128], index: 6, kind: output, shape index: {1}]
  %7 = xla_tuple %s5, %s6
  %s8 = sld [smem:[#allocation0]]
  $region38: #{tpu_custom_call.1} parent=0
    _
  %s10 = ssub.s32 1, %s8
  %s11 = scalar_select 0, %s10, %s8
  $region1: #{tpu_custom_call.1} parent=0
    #allocation2 [shape = 'u8[131072]{0}', space=vmem, size = 0x20000, scoped, tag = 'output window, operand 0, single buffered']
    #allocation3 [shape = 's32[1]{0}', space=sflag, size = 0x4, scoped, tag = 'scoped memory for tpu_custom_call.1']
    #allocation4 [shape = 'u8[131072]{0}', space=vmem, size = 0x20000, scoped, tag = 'output window, operand 1, single buffered']
    #allocation5 [shape = 's32[1]{0}', space=sflag, size = 0x4, scoped, tag = 'scoped memory for tpu_custom_call.1']
    %12 = vsyncpa [#allocation3], 0
    %13 = vsyncpa [#allocation5], 0
    // Predicated region
    $region2: #{tpu_custom_call.1} parent=1 // pred_check
      _
    $region3: #{tpu_custom_call.1} parent=1 // pred_check_branch
      %15 = sbr.rel (0) target = $region5
    $region4: #{tpu_custom_call.1} parent=1 // pred_region
      _
    $region5: #{tpu_custom_call.1} parent=1 // pred_fallthru
      _
    // Predicated region
    $region6: #{tpu_custom_call.1} parent=1 // pred_check
      _
    $region7: #{tpu_custom_call.1} parent=1 // pred_check_branch
      %17 = sbr.rel (0) target = $region9
    $region8: #{tpu_custom_call.1} parent=1 // pred_region
      _
    $region9: #{tpu_custom_call.1} parent=1 // pred_fallthru
      _
    // Predicated region
    $region10: #{tpu_custom_call.1} parent=1 // pred_check
      _
    $region11: #{tpu_custom_call.1} parent=1 // pred_check_branch
      %19 = sbr.rel (0) target = $region13
    $region12: #{tpu_custom_call.1} parent=1 // pred_region
      _
    $region13: #{tpu_custom_call.1} parent=1 // pred_fallthru
      _
    // Predicated region
    $region14: #{tpu_custom_call.1} parent=1 // pred_check
      _
    $region15: #{tpu_custom_call.1} parent=1 // pred_check_branch
      %21 = sbr.rel (0) target = $region17
    $region16: #{tpu_custom_call.1} parent=1 // pred_region
      _
    $region17: #{tpu_custom_call.1} parent=1 // pred_fallthru
      _
    // Predicated region
    $region18: #{tpu_custom_call.1} parent=1 // pred_check
      _
    $region19: #{tpu_custom_call.1} parent=1 // pred_check_branch
      %23 = sbr.rel (0) target = $region21
    $region20: #{tpu_custom_call.1} parent=1 // pred_region
      _
    $region21: #{tpu_custom_call.1} parent=1 // pred_fallthru
      _
    %v25 = vld [vmem:[%s0] sm:$0xff]
    %v26 = vld [vmem:[%s0 + $0x8] sm:$0xff]
    %v27 = vld [vmem:[%s0 + $0x10] sm:$0xff]
    %v28 = vld [vmem:[%s0 + $0x18] sm:$0xff]
    %v29 = vld [vmem:[%s0 + $0x20] sm:$0xff]
    %v30 = vld [vmem:[%s0 + $0x28] sm:$0xff]
    %v31 = vld [vmem:[%s0 + $0x30] sm:$0xff]
    %v32 = vld [vmem:[%s0 + $0x38] sm:$0xff]
    %v33 = vld [vmem:[%s0 + $0x40] sm:$0xff]
    %v34 = vld [vmem:[%s0 + $0x48] sm:$0xff]
    %v35 = vld [vmem:[%s0 + $0x50] sm:$0xff]
    %v36 = vld [vmem:[%s0 + $0x58] sm:$0xff]
    %v37 = vld [vmem:[%s0 + $0x60] sm:$0xff]
    %v38 = vld [vmem:[%s0 + $0x68] sm:$0xff]
    %v39 = vld [vmem:[%s0 + $0x70] sm:$0xff]
    %v40 = vld [vmem:[%s0 + $0x78] sm:$0xff]
    %v41 = vld [vmem:[%s0 + $0x80] sm:$0xff]
    %v42 = vld [vmem:[%s0 + $0x88] sm:$0xff]
    %v43 = vld [vmem:[%s0 + $0x90] sm:$0xff]
    %v44 = vld [vmem:[%s0 + $0x98] sm:$0xff]
    %v45 = vld [vmem:[%s0 + $0xa0] sm:$0xff]
    %v46 = vld [vmem:[%s0 + $0xa8] sm:$0xff]
    %v47 = vld [vmem:[%s0 + $0xb0] sm:$0xff]
    %v48 = vld [vmem:[%s0 + $0xb8] sm:$0xff]
    %v49 = vld [vmem:[%s0 + $0xc0] sm:$0xff]
    %v50 = vld [vmem:[%s0 + $0xc8] sm:$0xff]
    %v51 = vld [vmem:[%s0 + $0xd0] sm:$0xff]
    %v52 = vld [vmem:[%s0 + $0xd8] sm:$0xff]
    %v53 = vld [vmem:[%s0 + $0xe0] sm:$0xff]
    %v54 = vld [vmem:[%s0 + $0xe8] sm:$0xff]
    %v55 = vld [vmem:[%s0 + $0xf0] sm:$0xff]
    %v56 = vld [vmem:[%s0 + $0xf8] sm:$0xff]
    %v57 = vpack.c.bf16 %v26, %v25
    %v58 = vpack.c.bf16 %v28, %v27
    %v59 = vpack.c.bf16 %v30, %v29
    %v60 = vpack.c.bf16 %v32, %v31
    %v61 = vpack.c.bf16 %v34, %v33
    %v62 = vpack.c.bf16 %v36, %v35
    %v63 = vpack.c.bf16 %v38, %v37
    %v64 = vpack.c.bf16 %v40, %v39
    %v65 = vpack.c.bf16 %v42, %v41
    %v66 = vpack.c.bf16 %v44, %v43
    %v67 = vpack.c.bf16 %v46, %v45
    %v68 = vpack.c.bf16 %v48, %v47
    %v69 = vpack.c.bf16 %v50, %v49
    %v70 = vpack.c.bf16 %v52, %v51
    %v71 = vpack.c.bf16 %v54, %v53
    %v72 = vpack.c.bf16 %v56, %v55
    %v73 = vld [vmem:[%s1] sm:$0xf]
    %v74 = vld [vmem:[%s1 + $0x4] sm:$0xf]
    %v75 = vld [vmem:[%s4] sm:$0x1]
    %v76 = vperm.slane %v75, 0
    %v79 = vunpack.c.l.b16 %v73
    %v80 = vunpack.c.l.b16 %v74
    %v81 = vpack.c.b16 %v80, %v79
    %vm83 = vcmask 130048
    %v85 = vsel %vm83, %v57, 0
    %v88 = vsel %vm83, %v58, 0
    %v91 = vsel %vm83, %v59, 0
    %v94 = vsel %vm83, %v60, 0
    %v97 = vsel %vm83, %v61, 0
    %v100 = vsel %vm83, %v62, 0
    %v103 = vsel %vm83, %v63, 0
    %v106 = vsel %vm83, %v64, 0
    %v109 = vsel %vm83, %v65, 0
    %v112 = vsel %vm83, %v66, 0
    %v115 = vsel %vm83, %v67, 0
    %v118 = vsel %vm83, %v68, 0
    %v121 = vsel %vm83, %v69, 0
    %v124 = vsel %vm83, %v70, 0
    %v127 = vsel %vm83, %v71, 0
    %v130 = vsel %vm83, %v72, 0
    %132 = vmatpush.bf16.msra.mxu0 0
    %133 = vmatpush.bf16.msra.mxu0 0
    %134 = vmatpush.bf16.msra.mxu0 0
    %135 = vmatpush.bf16.msra.mxu0 0
    %136 = vmatpush.bf16.msra.mxu0 0
    %137 = vmatpush.bf16.msra.mxu0 0
    %138 = vmatpush.bf16.msra.mxu0 0
    %139 = vmatpush.bf16.msra.mxu0 %v81
    %140 = vmatmul.bf16.gmra.mxu0 %v85
    %v141 = vpop.f32.mrf.mxu0
    %v142 = vadd.f32 %v76, %v141
    %v143 = vpop.f32.mrf.mxu0
    %v144 = vadd.f32 %v76, %v143
    %145 = vmatmul.bf16.gmra.mxu0 %v88
    %v146 = vpop.f32.mrf.mxu0
    %v147 = vadd.f32 %v76, %v146
    %v148 = vpop.f32.mrf.mxu0
    %v149 = vadd.f32 %v76, %v148
    %150 = vmatmul.bf16.gmra.mxu0 %v91
    %v151 = vpop.f32.mrf.mxu0
    %v152 = vadd.f32 %v76, %v151
    %v153 = vpop.f32.mrf.mxu0
    %v154 = vadd.f32 %v76, %v153
    %155 = vmatmul.bf16.gmra.mxu0 %v94
    %v156 = vpop.f32.mrf.mxu0
    %v157 = vadd.f32 %v76, %v156
    %v158 = vpop.f32.mrf.mxu0
    %v159 = vadd.f32 %v76, %v158
    %160 = vmatmul.bf16.gmra.mxu0 %v97
    %v161 = vpop.f32.mrf.mxu0
    %v162 = vadd.f32 %v76, %v161
    %v163 = vpop.f32.mrf.mxu0
    %v164 = vadd.f32 %v76, %v163
    %165 = vmatmul.bf16.gmra.mxu0 %v100
    %v166 = vpop.f32.mrf.mxu0
    %v167 = vadd.f32 %v76, %v166
    %v168 = vpop.f32.mrf.mxu0
    %v169 = vadd.f32 %v76, %v168
    %170 = vmatmul.bf16.gmra.mxu0 %v103
    %v171 = vpop.f32.mrf.mxu0
    %v172 = vadd.f32 %v76, %v171
    %v173 = vpop.f32.mrf.mxu0
    %v174 = vadd.f32 %v76, %v173
    %175 = vmatmul.bf16.gmra.mxu0 %v106
    %v176 = vpop.f32.mrf.mxu0
    %v177 = vadd.f32 %v76, %v176
    %v178 = vpop.f32.mrf.mxu0
    %v179 = vadd.f32 %v76, %v178
    %180 = vmatmul.bf16.gmra.mxu0 %v109
    %v181 = vpop.f32.mrf.mxu0
    %v182 = vadd.f32 %v76, %v181
    %v183 = vpop.f32.mrf.mxu0
    %v184 = vadd.f32 %v76, %v183
    %185 = vmatmul.bf16.gmra.mxu0 %v112
    %v186 = vpop.f32.mrf.mxu0
    %v187 = vadd.f32 %v76, %v186
    %v188 = vpop.f32.mrf.mxu0
    %v189 = vadd.f32 %v76, %v188
    %190 = vmatmul.bf16.gmra.mxu0 %v115
    %v191 = vpop.f32.mrf.mxu0
    %v192 = vadd.f32 %v76, %v191
    %v193 = vpop.f32.mrf.mxu0
    %v194 = vadd.f32 %v76, %v193
    %195 = vmatmul.bf16.gmra.mxu0 %v118
    %v196 = vpop.f32.mrf.mxu0
    %v197 = vadd.f32 %v76, %v196
    %v198 = vpop.f32.mrf.mxu0
    %v199 = vadd.f32 %v76, %v198
    %200 = vmatmul.bf16.gmra.mxu0 %v121
    %v201 = vpop.f32.mrf.mxu0
    %v202 = vadd.f32 %v76, %v201
    %v203 = vpop.f32.mrf.mxu0
    %v204 = vadd.f32 %v76, %v203
    %205 = vmatmul.bf16.gmra.mxu0 %v124
    %v206 = vpop.f32.mrf.mxu0
    %v207 = vadd.f32 %v76, %v206
    %v208 = vpop.f32.mrf.mxu0
    %v209 = vadd.f32 %v76, %v208
    %210 = vmatmul.bf16.gmra.mxu0 %v127
    %v211 = vpop.f32.mrf.mxu0
    %v212 = vadd.f32 %v76, %v211
    %v213 = vpop.f32.mrf.mxu0
    %v214 = vadd.f32 %v76, %v213
    %215 = vmatmul.bf16.gmra.mxu0 %v130
    %v216 = vpop.f32.mrf.mxu0
    %v217 = vadd.f32 %v76, %v216
    %v218 = vpop.f32.mrf.mxu0
    %v219 = vadd.f32 %v76, %v218
    %220 = vdwg.mxu0
    %v221 = vmax.f32 %v142, 0.0
    %v222 = vmax.f32 %v144, 0.0
    %v223 = vmax.f32 %v147, 0.0
    %v224 = vmax.f32 %v149, 0.0
    %v225 = vmax.f32 %v152, 0.0
    %v226 = vmax.f32 %v154, 0.0
    %v227 = vmax.f32 %v157, 0.0
    %v228 = vmax.f32 %v159, 0.0
    %v229 = vmax.f32 %v162, 0.0
    %v230 = vmax.f32 %v164, 0.0
    %v231 = vmax.f32 %v167, 0.0
    %v232 = vmax.f32 %v169, 0.0
    %v233 = vmax.f32 %v172, 0.0
    %v234 = vmax.f32 %v174, 0.0
    %v235 = vmax.f32 %v177, 0.0
    %v236 = vmax.f32 %v179, 0.0
    %v237 = vmax.f32 %v182, 0.0
    %v238 = vmax.f32 %v184, 0.0
    %v239 = vmax.f32 %v187, 0.0
    %v240 = vmax.f32 %v189, 0.0
    %v241 = vmax.f32 %v192, 0.0
    %v242 = vmax.f32 %v194, 0.0
    %v243 = vmax.f32 %v197, 0.0
    %v244 = vmax.f32 %v199, 0.0
    %v245 = vmax.f32 %v202, 0.0
    %v246 = vmax.f32 %v204, 0.0
    %v247 = vmax.f32 %v207, 0.0
    %v248 = vmax.f32 %v209, 0.0
    %v249 = vmax.f32 %v212, 0.0
    %v250 = vmax.f32 %v214, 0.0
    %v251 = vmax.f32 %v217, 0.0
    %v252 = vmax.f32 %v219, 0.0
    %253 = vst [vmem:[#allocation2] sm:$0xff] %v221
    %254 = vst [vmem:[#allocation2 + $0x8] sm:$0xff] %v222
    %255 = vst [vmem:[#allocation2 + $0x10] sm:$0xff] %v223
    %256 = vst [vmem:[#allocation2 + $0x18] sm:$0xff] %v224
    %257 = vst [vmem:[#allocation2 + $0x20] sm:$0xff] %v225
    %258 = vst [vmem:[#allocation2 + $0x28] sm:$0xff] %v226
    %259 = vst [vmem:[#allocation2 + $0x30] sm:$0xff] %v227
    %260 = vst [vmem:[#allocation2 + $0x38] sm:$0xff] %v228
    %261 = vst [vmem:[#allocation2 + $0x40] sm:$0xff] %v229
    %262 = vst [vmem:[#allocation2 + $0x48] sm:$0xff] %v230
    %263 = vst [vmem:[#allocation2 + $0x50] sm:$0xff] %v231
    %264 = vst [vmem:[#allocation2 + $0x58] sm:$0xff] %v232
    %265 = vst [vmem:[#allocation2 + $0x60] sm:$0xff] %v233
    %266 = vst [vmem:[#allocation2 + $0x68] sm:$0xff] %v234
    %267 = vst [vmem:[#allocation2 + $0x70] sm:$0xff] %v235
    %268 = vst [vmem:[#allocation2 + $0x78] sm:$0xff] %v236
    %269 = vst [vmem:[#allocation2 + $0x80] sm:$0xff] %v237
    %270 = vst [vmem:[#allocation2 + $0x88] sm:$0xff] %v238
    %271 = vst [vmem:[#allocation2 + $0x90] sm:$0xff] %v239
    %272 = vst [vmem:[#allocation2 + $0x98] sm:$0xff] %v240
    %273 = vst [vmem:[#allocation2 + $0xa0] sm:$0xff] %v241
    %274 = vst [vmem:[#allocation2 + $0xa8] sm:$0xff] %v242
    %275 = vst [vmem:[#allocation2 + $0xb0] sm:$0xff] %v243
    %276 = vst [vmem:[#allocation2 + $0xb8] sm:$0xff] %v244
    %277 = vst [vmem:[#allocation2 + $0xc0] sm:$0xff] %v245
    %278 = vst [vmem:[#allocation2 + $0xc8] sm:$0xff] %v246
    %279 = vst [vmem:[#allocation2 + $0xd0] sm:$0xff] %v247
    %280 = vst [vmem:[#allocation2 + $0xd8] sm:$0xff] %v248
    %281 = vst [vmem:[#allocation2 + $0xe0] sm:$0xff] %v249
    %282 = vst [vmem:[#allocation2 + $0xe8] sm:$0xff] %v250
    %283 = vst [vmem:[#allocation2 + $0xf0] sm:$0xff] %v251
    %284 = vst [vmem:[#allocation2 + $0xf8] sm:$0xff] %v252
    %v285 = vpack.c.bf16 %v222, %v221
    %v286 = vpack.c.bf16 %v224, %v223
    %v287 = vpack.c.bf16 %v226, %v225
    %v288 = vpack.c.bf16 %v228, %v227
    %v289 = vpack.c.bf16 %v230, %v229
    %v290 = vpack.c.bf16 %v232, %v231
    %v291 = vpack.c.bf16 %v234, %v233
    %v292 = vpack.c.bf16 %v236, %v235
    %v293 = vpack.c.bf16 %v238, %v237
    %v294 = vpack.c.bf16 %v240, %v239
    %v295 = vpack.c.bf16 %v242, %v241
    %v296 = vpack.c.bf16 %v244, %v243
    %v297 = vpack.c.bf16 %v246, %v245
    %v298 = vpack.c.bf16 %v248, %v247
    %v299 = vpack.c.bf16 %v250, %v249
    %v300 = vpack.c.bf16 %v252, %v251
    %v301 = vld [vmem:[%s2] sm:$0xf]
    %v302 = vld [vmem:[%s2 + $0x4] sm:$0xf]
    %v303 = vld [vmem:[%s2 + $0x8] sm:$0xf]
    %v304 = vld [vmem:[%s2 + $0xc] sm:$0xf]
    %v305 = vld [vmem:[%s2 + $0x10] sm:$0xf]
    %v306 = vld [vmem:[%s2 + $0x14] sm:$0xf]
    %v307 = vld [vmem:[%s2 + $0x18] sm:$0xf]
    %v308 = vld [vmem:[%s2 + $0x1c] sm:$0xf]
    %v309 = vld [vmem:[%s2 + $0x20] sm:$0xf]
    %v310 = vld [vmem:[%s2 + $0x24] sm:$0xf]
    %v311 = vld [vmem:[%s2 + $0x28] sm:$0xf]
    %v312 = vld [vmem:[%s2 + $0x2c] sm:$0xf]
    %v313 = vld [vmem:[%s2 + $0x30] sm:$0xf]
    %v314 = vld [vmem:[%s2 + $0x34] sm:$0xf]
    %v315 = vld [vmem:[%s2 + $0x38] sm:$0xf]
    %v316 = vld [vmem:[%s2 + $0x3c] sm:$0xf]
    %v317 = vld [vmem:[%s4 + $0x1] sm:$0x1]
    %v318 = vperm.slane %v317, 0
    %v335 = vunpack.c.l.b16 %v301
    %v336 = vunpack.c.l.b16 %v302
    %v337 = vunpack.c.l.b16 %v303
    %v338 = vunpack.c.l.b16 %v304
    %v339 = vunpack.c.l.b16 %v305
    %v340 = vunpack.c.l.b16 %v306
    %v341 = vunpack.c.l.b16 %v307
    %v342 = vunpack.c.l.b16 %v308
    %v343 = vunpack.c.l.b16 %v309
    %v344 = vunpack.c.l.b16 %v310
    %v345 = vunpack.c.l.b16 %v311
    %v346 = vunpack.c.l.b16 %v312
    %v347 = vunpack.c.l.b16 %v313
    %v348 = vunpack.c.l.b16 %v314
    %v349 = vunpack.c.l.b16 %v315
    %v350 = vunpack.c.l.b16 %v316
    %v351 = vpack.c.b16 %v336, %v335
    %v352 = vpack.c.b16 %v338, %v337
    %v353 = vpack.c.b16 %v340, %v339
    %v354 = vpack.c.b16 %v342, %v341
    %v355 = vpack.c.b16 %v344, %v343
    %v356 = vpack.c.b16 %v346, %v345
    %v357 = vpack.c.b16 %v348, %v347
    %v358 = vpack.c.b16 %v350, %v349
    %367 = vmatpush.bf16.msra.mxu0 %v358
    %368 = vmatpush.bf16.msra.mxu0 %v357
    %369 = vmatpush.bf16.msra.mxu0 %v356
    %370 = vmatpush.bf16.msra.mxu0 %v355
    %371 = vmatpush.bf16.msra.mxu0 %v354
    %372 = vmatpush.bf16.msra.mxu0 %v353
    %373 = vmatpush.bf16.msra.mxu0 %v352
    %374 = vmatpush.bf16.msra.mxu0 %v351
    %375 = vmatmul.bf16.gmra.mxu0 %v285
    %v376 = vpop.f32.mrf.mxu0
    %v377 = vadd.f32 %v318, %v376
    %v378 = vpop.f32.mrf.mxu0
    %v379 = vadd.f32 %v318, %v378
    %380 = vmatmul.bf16.gmra.mxu0 %v286
    %v381 = vpop.f32.mrf.mxu0
    %v382 = vadd.f32 %v318, %v381
    %v383 = vpop.f32.mrf.mxu0
    %v384 = vadd.f32 %v318, %v383
    %385 = vmatmul.bf16.gmra.mxu0 %v287
    %v386 = vpop.f32.mrf.mxu0
    %v387 = vadd.f32 %v318, %v386
    %v388 = vpop.f32.mrf.mxu0
    %v389 = vadd.f32 %v318, %v388
    %390 = vmatmul.bf16.gmra.mxu0 %v288
    %v391 = vpop.f32.mrf.mxu0
    %v392 = vadd.f32 %v318, %v391
    %v393 = vpop.f32.mrf.mxu0
    %v394 = vadd.f32 %v318, %v393
    %395 = vmatmul.bf16.gmra.mxu0 %v289
    %v396 = vpop.f32.mrf.mxu0
    %v397 = vadd.f32 %v318, %v396
    %v398 = vpop.f32.mrf.mxu0
    %v399 = vadd.f32 %v318, %v398
    %400 = vmatmul.bf16.gmra.mxu0 %v290
    %v401 = vpop.f32.mrf.mxu0
    %v402 = vadd.f32 %v318, %v401
    %v403 = vpop.f32.mrf.mxu0
    %v404 = vadd.f32 %v318, %v403
    %405 = vmatmul.bf16.gmra.mxu0 %v291
    %v406 = vpop.f32.mrf.mxu0
    %v407 = vadd.f32 %v318, %v406
    %v408 = vpop.f32.mrf.mxu0
    %v409 = vadd.f32 %v318, %v408
    %410 = vmatmul.bf16.gmra.mxu0 %v292
    %v411 = vpop.f32.mrf.mxu0
    %v412 = vadd.f32 %v318, %v411
    %v413 = vpop.f32.mrf.mxu0
    %v414 = vadd.f32 %v318, %v413
    %415 = vmatmul.bf16.gmra.mxu0 %v293
    %v416 = vpop.f32.mrf.mxu0
    %v417 = vadd.f32 %v318, %v416
    %v418 = vpop.f32.mrf.mxu0
    %v419 = vadd.f32 %v318, %v418
    %420 = vmatmul.bf16.gmra.mxu0 %v294
    %v421 = vpop.f32.mrf.mxu0
    %v422 = vadd.f32 %v318, %v421
    %v423 = vpop.f32.mrf.mxu0
    %v424 = vadd.f32 %v318, %v423
    %425 = vmatmul.bf16.gmra.mxu0 %v295
    %v426 = vpop.f32.mrf.mxu0
    %v427 = vadd.f32 %v318, %v426
    %v428 = vpop.f32.mrf.mxu0
    %v429 = vadd.f32 %v318, %v428
    %430 = vmatmul.bf16.gmra.mxu0 %v296
    %v431 = vpop.f32.mrf.mxu0
    %v432 = vadd.f32 %v318, %v431
    %v433 = vpop.f32.mrf.mxu0
    %v434 = vadd.f32 %v318, %v433
    %435 = vmatmul.bf16.gmra.mxu0 %v297
    %v436 = vpop.f32.mrf.mxu0
    %v437 = vadd.f32 %v318, %v436
    %v438 = vpop.f32.mrf.mxu0
    %v439 = vadd.f32 %v318, %v438
    %440 = vmatmul.bf16.gmra.mxu0 %v298
    %v441 = vpop.f32.mrf.mxu0
    %v442 = vadd.f32 %v318, %v441
    %v443 = vpop.f32.mrf.mxu0
    %v444 = vadd.f32 %v318, %v443
    %445 = vmatmul.bf16.gmra.mxu0 %v299
    %v446 = vpop.f32.mrf.mxu0
    %v447 = vadd.f32 %v318, %v446
    %v448 = vpop.f32.mrf.mxu0
    %v449 = vadd.f32 %v318, %v448
    %450 = vmatmul.bf16.gmra.mxu0 %v300
    %v451 = vpop.f32.mrf.mxu0
    %v452 = vadd.f32 %v318, %v451
    %v453 = vpop.f32.mrf.mxu0
    %v454 = vadd.f32 %v318, %v453
    %455 = vdwg.mxu0
    %v456 = vmax.f32 %v377, 0.0
    %v457 = vmax.f32 %v379, 0.0
    %v458 = vmax.f32 %v382, 0.0
    %v459 = vmax.f32 %v384, 0.0
    %v460 = vmax.f32 %v387, 0.0
    %v461 = vmax.f32 %v389, 0.0
    %v462 = vmax.f32 %v392, 0.0
    %v463 = vmax.f32 %v394, 0.0
    %v464 = vmax.f32 %v397, 0.0
    %v465 = vmax.f32 %v399, 0.0
    %v466 = vmax.f32 %v402, 0.0
    %v467 = vmax.f32 %v404, 0.0
    %v468 = vmax.f32 %v407, 0.0
    %v469 = vmax.f32 %v409, 0.0
    %v470 = vmax.f32 %v412, 0.0
    %v471 = vmax.f32 %v414, 0.0
    %v472 = vmax.f32 %v417, 0.0
    %v473 = vmax.f32 %v419, 0.0
    %v474 = vmax.f32 %v422, 0.0
    %v475 = vmax.f32 %v424, 0.0
    %v476 = vmax.f32 %v427, 0.0
    %v477 = vmax.f32 %v429, 0.0
    %v478 = vmax.f32 %v432, 0.0
    %v479 = vmax.f32 %v434, 0.0
    %v480 = vmax.f32 %v437, 0.0
    %v481 = vmax.f32 %v439, 0.0
    %v482 = vmax.f32 %v442, 0.0
    %v483 = vmax.f32 %v444, 0.0
    %v484 = vmax.f32 %v447, 0.0
    %v485 = vmax.f32 %v449, 0.0
    %v486 = vmax.f32 %v452, 0.0
    %v487 = vmax.f32 %v454, 0.0
    %v488 = vpack.c.bf16 %v457, %v456
    %v489 = vpack.c.bf16 %v459, %v458
    %v490 = vpack.c.bf16 %v461, %v460
    %v491 = vpack.c.bf16 %v463, %v462
    %v492 = vpack.c.bf16 %v465, %v464
    %v493 = vpack.c.bf16 %v467, %v466
    %v494 = vpack.c.bf16 %v469, %v468
    %v495 = vpack.c.bf16 %v471, %v470
    %v496 = vpack.c.bf16 %v473, %v472
    %v497 = vpack.c.bf16 %v475, %v474
    %v498 = vpack.c.bf16 %v477, %v476
    %v499 = vpack.c.bf16 %v479, %v478
    %v500 = vpack.c.bf16 %v481, %v480
    %v501 = vpack.c.bf16 %v483, %v482
    %v502 = vpack.c.bf16 %v485, %v484
    %v503 = vpack.c.bf16 %v487, %v486
    %v504 = vld [vmem:[%s3] sm:$0xf]
    %v505 = vld [vmem:[%s3 + $0x4] sm:$0xf]
    %v506 = vld [vmem:[%s3 + $0x8] sm:$0xf]
    %v507 = vld [vmem:[%s3 + $0xc] sm:$0xf]
    %v508 = vld [vmem:[%s3 + $0x10] sm:$0xf]
    %v509 = vld [vmem:[%s3 + $0x14] sm:$0xf]
    %v510 = vld [vmem:[%s3 + $0x18] sm:$0xf]
    %v511 = vld [vmem:[%s3 + $0x1c] sm:$0xf]
    %v512 = vld [vmem:[%s3 + $0x20] sm:$0xf]
    %v513 = vld [vmem:[%s3 + $0x24] sm:$0xf]
    %v514 = vld [vmem:[%s3 + $0x28] sm:$0xf]
    %v515 = vld [vmem:[%s3 + $0x2c] sm:$0xf]
    %v516 = vld [vmem:[%s3 + $0x30] sm:$0xf]
    %v517 = vld [vmem:[%s3 + $0x34] sm:$0xf]
    %v518 = vld [vmem:[%s3 + $0x38] sm:$0xf]
    %v519 = vld [vmem:[%s3 + $0x3c] sm:$0xf]
    %v520 = vld [vmem:[%s4 + $0x2] sm:$0x1]
    %v521 = vperm.slane %v520, 0
    %v538 = vunpack.c.l.b16 %v504
    %v539 = vunpack.c.l.b16 %v505
    %v540 = vunpack.c.l.b16 %v506
    %v541 = vunpack.c.l.b16 %v507
    %v542 = vunpack.c.l.b16 %v508
    %v543 = vunpack.c.l.b16 %v509
    %v544 = vunpack.c.l.b16 %v510
    %v545 = vunpack.c.l.b16 %v511
    %v546 = vunpack.c.l.b16 %v512
    %v547 = vunpack.c.l.b16 %v513
    %v548 = vunpack.c.l.b16 %v514
    %v549 = vunpack.c.l.b16 %v515
    %v550 = vunpack.c.l.b16 %v516
    %v551 = vunpack.c.l.b16 %v517
    %v552 = vunpack.c.l.b16 %v518
    %v553 = vunpack.c.l.b16 %v519
    %v554 = vpack.c.b16 %v539, %v538
    %v555 = vpack.c.b16 %v541, %v540
    %v556 = vpack.c.b16 %v543, %v542
    %v557 = vpack.c.b16 %v545, %v544
    %v558 = vpack.c.b16 %v547, %v546
    %v559 = vpack.c.b16 %v549, %v548
    %v560 = vpack.c.b16 %v551, %v550
    %v561 = vpack.c.b16 %v553, %v552
    %570 = vmatpush.bf16.msra.mxu0 %v561
    %571 = vmatpush.bf16.msra.mxu0 %v560
    %572 = vmatpush.bf16.msra.mxu0 %v559
    %573 = vmatpush.bf16.msra.mxu0 %v558
    %574 = vmatpush.bf16.msra.mxu0 %v557
    %575 = vmatpush.bf16.msra.mxu0 %v556
    %576 = vmatpush.bf16.msra.mxu0 %v555
    %577 = vmatpush.bf16.msra.mxu0 %v554
    %578 = vmatmul.bf16.gmra.mxu0 %v488
    %v579 = vpop.f32.mrf.mxu0
    %v580 = vadd.f32 %v521, %v579
    %v581 = vpop.f32.mrf.mxu0
    %v582 = vadd.f32 %v521, %v581
    %583 = vmatmul.bf16.gmra.mxu0 %v489
    %v584 = vpop.f32.mrf.mxu0
    %v585 = vadd.f32 %v521, %v584
    %v586 = vpop.f32.mrf.mxu0
    %v587 = vadd.f32 %v521, %v586
    %588 = vmatmul.bf16.gmra.mxu0 %v490
    %v589 = vpop.f32.mrf.mxu0
    %v590 = vadd.f32 %v521, %v589
    %v591 = vpop.f32.mrf.mxu0
    %v592 = vadd.f32 %v521, %v591
    %593 = vmatmul.bf16.gmra.mxu0 %v491
    %v594 = vpop.f32.mrf.mxu0
    %v595 = vadd.f32 %v521, %v594
    %v596 = vpop.f32.mrf.mxu0
    %v597 = vadd.f32 %v521, %v596
    %598 = vmatmul.bf16.gmra.mxu0 %v492
    %v599 = vpop.f32.mrf.mxu0
    %v600 = vadd.f32 %v521, %v599
    %v601 = vpop.f32.mrf.mxu0
    %v602 = vadd.f32 %v521, %v601
    %603 = vmatmul.bf16.gmra.mxu0 %v493
    %v604 = vpop.f32.mrf.mxu0
    %v605 = vadd.f32 %v521, %v604
    %v606 = vpop.f32.mrf.mxu0
    %v607 = vadd.f32 %v521, %v606
    %608 = vmatmul.bf16.gmra.mxu0 %v494
    %v609 = vpop.f32.mrf.mxu0
    %v610 = vadd.f32 %v521, %v609
    %v611 = vpop.f32.mrf.mxu0
    %v612 = vadd.f32 %v521, %v611
    %613 = vmatmul.bf16.gmra.mxu0 %v495
    %v614 = vpop.f32.mrf.mxu0
    %v615 = vadd.f32 %v521, %v614
    %v616 = vpop.f32.mrf.mxu0
    %v617 = vadd.f32 %v521, %v616
    %618 = vmatmul.bf16.gmra.mxu0 %v496
    %v619 = vpop.f32.mrf.mxu0
    %v620 = vadd.f32 %v521, %v619
    %v621 = vpop.f32.mrf.mxu0
    %v622 = vadd.f32 %v521, %v621
    %623 = vmatmul.bf16.gmra.mxu0 %v497
    %v624 = vpop.f32.mrf.mxu0
    %v625 = vadd.f32 %v521, %v624
    %v626 = vpop.f32.mrf.mxu0
    %v627 = vadd.f32 %v521, %v626
    %628 = vmatmul.bf16.gmra.mxu0 %v498
    %v629 = vpop.f32.mrf.mxu0
    %v630 = vadd.f32 %v521, %v629
    %v631 = vpop.f32.mrf.mxu0
    %v632 = vadd.f32 %v521, %v631
    %633 = vmatmul.bf16.gmra.mxu0 %v499
    %v634 = vpop.f32.mrf.mxu0
    %v635 = vadd.f32 %v521, %v634
    %v636 = vpop.f32.mrf.mxu0
    %v637 = vadd.f32 %v521, %v636
    %638 = vmatmul.bf16.gmra.mxu0 %v500
    %v639 = vpop.f32.mrf.mxu0
    %v640 = vadd.f32 %v521, %v639
    %v641 = vpop.f32.mrf.mxu0
    %v642 = vadd.f32 %v521, %v641
    %643 = vmatmul.bf16.gmra.mxu0 %v501
    %v644 = vpop.f32.mrf.mxu0
    %v645 = vadd.f32 %v521, %v644
    %v646 = vpop.f32.mrf.mxu0
    %v647 = vadd.f32 %v521, %v646
    %648 = vmatmul.bf16.gmra.mxu0 %v502
    %v649 = vpop.f32.mrf.mxu0
    %v650 = vadd.f32 %v521, %v649
    %v651 = vpop.f32.mrf.mxu0
    %v652 = vadd.f32 %v521, %v651
    %653 = vmatmul.bf16.gmra.mxu0 %v503
    %v654 = vpop.f32.mrf.mxu0
    %v655 = vadd.f32 %v521, %v654
    %v656 = vpop.f32.mrf.mxu0
    %v657 = vadd.f32 %v521, %v656
    %658 = vdwg.mxu0
    %v659 = vlaneseq
    %v660 = vand.u32 %v659, 127
    %vm661 = vcmp.lt.s32.totalorder %v660, 5
    %v662 = vsel %vm661, %v580, -inf
    %v663 = vsel %vm661, %v582, -inf
    %v664 = vsel %vm661, %v585, -inf
    %v665 = vsel %vm661, %v587, -inf
    %v666 = vsel %vm661, %v590, -inf
    %v667 = vsel %vm661, %v592, -inf
    %v668 = vsel %vm661, %v595, -inf
    %v669 = vsel %vm661, %v597, -inf
    %v670 = vsel %vm661, %v600, -inf
    %v671 = vsel %vm661, %v602, -inf
    %v672 = vsel %vm661, %v605, -inf
    %v673 = vsel %vm661, %v607, -inf
    %v674 = vsel %vm661, %v610, -inf
    %v675 = vsel %vm661, %v612, -inf
    %v676 = vsel %vm661, %v615, -inf
    %v677 = vsel %vm661, %v617, -inf
    %v678 = vsel %vm661, %v620, -inf
    %v679 = vsel %vm661, %v622, -inf
    %v680 = vsel %vm661, %v625, -inf
    %v681 = vsel %vm661, %v627, -inf
    %v682 = vsel %vm661, %v630, -inf
    %v683 = vsel %vm661, %v632, -inf
    %v684 = vsel %vm661, %v635, -inf
    %v685 = vsel %vm661, %v637, -inf
    %v686 = vsel %vm661, %v640, -inf
    %v687 = vsel %vm661, %v642, -inf
    %v688 = vsel %vm661, %v645, -inf
    %v689 = vsel %vm661, %v647, -inf
    %v690 = vsel %vm661, %v650, -inf
    %v691 = vsel %vm661, %v652, -inf
    %v692 = vsel %vm661, %v655, -inf
    %v693 = vsel %vm661, %v657, -inf
    %694 = vst [vmem:[#allocation4] sm:$0xff] %v662
    %695 = vst [vmem:[#allocation4 + $0x8] sm:$0xff] %v663
    %696 = vst [vmem:[#allocation4 + $0x10] sm:$0xff] %v664
    %697 = vst [vmem:[#allocation4 + $0x18] sm:$0xff] %v665
    %698 = vst [vmem:[#allocation4 + $0x20] sm:$0xff] %v666
    %699 = vst [vmem:[#allocation4 + $0x28] sm:$0xff] %v667
    %700 = vst [vmem:[#allocation4 + $0x30] sm:$0xff] %v668
    %701 = vst [vmem:[#allocation4 + $0x38] sm:$0xff] %v669
    %702 = vst [vmem:[#allocation4 + $0x40] sm:$0xff] %v670
    %703 = vst [vmem:[#allocation4 + $0x48] sm:$0xff] %v671
    %704 = vst [vmem:[#allocation4 + $0x50] sm:$0xff] %v672
    %705 = vst [vmem:[#allocation4 + $0x58] sm:$0xff] %v673
    %706 = vst [vmem:[#allocation4 + $0x60] sm:$0xff] %v674
    %707 = vst [vmem:[#allocation4 + $0x68] sm:$0xff] %v675
    %708 = vst [vmem:[#allocation4 + $0x70] sm:$0xff] %v676
    %709 = vst [vmem:[#allocation4 + $0x78] sm:$0xff] %v677
    %710 = vst [vmem:[#allocation4 + $0x80] sm:$0xff] %v678
    %711 = vst [vmem:[#allocation4 + $0x88] sm:$0xff] %v679
    %712 = vst [vmem:[#allocation4 + $0x90] sm:$0xff] %v680
    %713 = vst [vmem:[#allocation4 + $0x98] sm:$0xff] %v681
    %714 = vst [vmem:[#allocation4 + $0xa0] sm:$0xff] %v682
    %715 = vst [vmem:[#allocation4 + $0xa8] sm:$0xff] %v683
    %716 = vst [vmem:[#allocation4 + $0xb0] sm:$0xff] %v684
    %717 = vst [vmem:[#allocation4 + $0xb8] sm:$0xff] %v685
    %718 = vst [vmem:[#allocation4 + $0xc0] sm:$0xff] %v686
    %719 = vst [vmem:[#allocation4 + $0xc8] sm:$0xff] %v687
    %720 = vst [vmem:[#allocation4 + $0xd0] sm:$0xff] %v688
    %721 = vst [vmem:[#allocation4 + $0xd8] sm:$0xff] %v689
    %722 = vst [vmem:[#allocation4 + $0xe0] sm:$0xff] %v690
    %723 = vst [vmem:[#allocation4 + $0xe8] sm:$0xff] %v691
    %724 = vst [vmem:[#allocation4 + $0xf0] sm:$0xff] %v692
    %725 = vst [vmem:[#allocation4 + $0xf8] sm:$0xff] %v693
    // Predicated region
    $region22: #{tpu_custom_call.1} parent=1 // pred_check
      _
    $region23: #{tpu_custom_call.1} parent=1 // pred_check_branch
      %727 = sbr.rel (0) target = $region25
    $region24: #{tpu_custom_call.1} parent=1 // pred_region
      %729 = vsyncadd [#allocation3], 0
      %s730 = sshll.u32 [#allocation2], 4
      %s731 = int_to_ptr.vmem [resolvable:$true] %s730
      %s732 = sshll.u32 %s5, 4
      %s733 = int_to_ptr.hbm [resolvable:$true] %s732
      %738 = dma.vmem_to_hbm [thread:$0]  %s731, 4096, %s733, [#allocation3], 128, 128, 8
    $region25: #{tpu_custom_call.1} parent=1 // pred_fallthru
      _
    // Predicated region
    $region26: #{tpu_custom_call.1} parent=1 // pred_check
      _
    $region27: #{tpu_custom_call.1} parent=1 // pred_check_branch
      %740 = sbr.rel (0) target = $region29
    $region28: #{tpu_custom_call.1} parent=1 // pred_region
      %742 = vsyncadd [#allocation5], 0
      %s743 = sshll.u32 [#allocation4], 4
      %s744 = int_to_ptr.vmem [resolvable:$true] %s743
      %s745 = sshll.u32 %s6, 4
      %s746 = int_to_ptr.hbm [resolvable:$true] %s745
      %751 = dma.vmem_to_hbm [thread:$0]  %s744, 4096, %s746, [#allocation5], 128, 128, 8
    $region29: #{tpu_custom_call.1} parent=1 // pred_fallthru
      _
    // Predicated region
    $region30: #{tpu_custom_call.1} parent=1 // pred_check
      _
    $region31: #{tpu_custom_call.1} parent=1 // pred_check_branch
      %753 = sbr.rel (0) target = $region33
    $region32: #{tpu_custom_call.1} parent=1 // pred_region
      %755 = dma.done [#allocation3], 4096
    $region33: #{tpu_custom_call.1} parent=1 // pred_fallthru
      _
    // Predicated region
    $region34: #{tpu_custom_call.1} parent=1 // pred_check
      _
    $region35: #{tpu_custom_call.1} parent=1 // pred_check_branch
      %757 = sbr.rel (0) target = $region37
    $region36: #{tpu_custom_call.1} parent=1 // pred_region
      %759 = dma.done [#allocation5], 4096
    $region37: #{tpu_custom_call.1} parent=1 // pred_fallthru
      _
    %760 = vsyncpa [#allocation3], 1
    %761 = vsyncpa [#allocation5], 1

</llo_original>
